<compile_context>
chip_gen: v6e
topology: v6e:2x2x1
jax: 0.10.0
libtpu: 0.0.40
codegen_flags: <defaults>
</compile_context>

<pallas_src>
import functools

import jax
import jax.numpy as jnp
from jax.experimental import pallas as pl
from jax.experimental.pallas import tpu as pltpu

BN_EPS = 1e-5


def _make_act(name):
    name = name.lower()
    if name == "gelu":
        return jax.nn.gelu
    if name == "selu":
        return jax.nn.selu
    if name == "silu":
        return jax.nn.silu
    if name == "hardswish":
        return jax.nn.hard_swish
    if name == "leakyrelu":
        # matches the module's get_act: nn.LeakyReLU(negative_slope=0.1)
        return lambda x: jnp.where(x > 0, x, jnp.float32(0.1) * x)
    # TODO(synk): 'rrelu' uses a randomly sampled slope in training mode; no deterministic equivalent.
    return lambda x: jnp.maximum(x, jnp.float32(0.0))  # 'relu' (module default)


# ----------------------------- Pallas kernel ---------------------------------

def global_extraction_kernel(x_ref, w0_ref, sh0_ref, w1_ref, sh1_ref,
                             w2_ref, sh2_ref, o_ref, *, blocks, act):
    """x_ref:  (C_in, TG)  f32   -- one batch element, TG positions (lane-dense)
       w0_ref: (C_out, C_in)            bf16, BN scale already folded in
       sh0_ref:(C_out, 1)               f32 folded conv-bias + BN shift
       w1_ref: (blocks, C_hid, C_out)   bf16   (ResConv1dBR.net1)
       sh1_ref:(blocks, C_hid, 1)       f32
       w2_ref: (blocks, C_out, C_hid)   bf16   (ResConv1dBR.net2, no activation)
       sh2_ref:(blocks, C_out, 1)       f32
       o_ref:  (C_out, TG)              bf16 (or f32 if requested)"""
    # cast in-kernel (input DMA stays f32 from HBM; no extra XLA pass in the wrapper)
    x = x_ref[...].astype(jnp.bfloat16)

    # transfer: Conv1d(k=1) + BN + act   (f32 accumulation / f32 elementwise)
    h32 = jnp.dot(w0_ref[...], x, preferred_element_type=jnp.float32)
    h32 = act(h32 + sh0_ref[...])

    # ResConv1dBR blocks: act(net2(net1(h)) + h); residual carried in bf16
    for blk in range(blocks):
        h = h32.astype(jnp.bfloat16)
        r = jnp.dot(w1_ref[blk], h, preferred_element_type=jnp.float32)
        r = act(r + sh1_ref[blk])
        r = jnp.dot(w2_ref[blk], r.astype(jnp.bfloat16),
                    preferred_element_type=jnp.float32)
        h32 = act(r + sh2_ref[blk] + h.astype(jnp.float32))

    o_ref[...] = h32.astype(o_ref.dtype)


def _choose_tile(B, G, tile_g):
    """Pick the position-tile width (lane axis)."""
    if G <= tile_g:
        # Single-tile fast path.  If B == 1, split G so a >=2-wide 'parallel'
        # grid axis exists and both v7x TensorCores get work.
        if B == 1 and G > 256:
            half = ((G + 1) // 2 + 127) // 128 * 128
            if half < G:
                return half
        return G
    assert tile_g % 128 == 0, "tile_g must be a multiple of 128"
    return tile_g


def global_extraction_forward(x, params, *, activation="relu", tile_g=4096,
                              out_dtype=jnp.bfloat16):
    """x: [B, C_in, G] f32 -> [B, C_out, G] out_dtype (same convention as the nn.Module)."""
    w0, sh0, w1, sh1, w2, sh2 = params
    B, c_in, G = x.shape
    c_out, c_in_w = w0.shape
    assert c_in_w == c_in
    blocks, c_hid, _ = w1.shape

    tg = _choose_tile(B, G, tile_g)
    n_g = pl.cdiv(G, tg)          # ragged last block handled by Pallas (no pad/slice)

    kernel = functools.partial(global_extraction_kernel,
                               blocks=blocks, act=_make_act(activation))

    out = pl.pallas_call(
        kernel,
        out_shape=jax.ShapeDtypeStruct((B, c_out, G), out_dtype),
        grid=(B, n_g),
        in_specs=[
            pl.BlockSpec((None, c_in, tg), lambda b, g: (b, 0, g)),
            pl.BlockSpec((c_out, c_in), lambda b, g: (0, 0)),
            pl.BlockSpec((c_out, 1), lambda b, g: (0, 0)),
            pl.BlockSpec((blocks, c_hid, c_out), lambda b, g: (0, 0, 0)),
            pl.BlockSpec((blocks, c_hid, 1), lambda b, g: (0, 0, 0)),
            pl.BlockSpec((blocks, c_out, c_hid), lambda b, g: (0, 0, 0)),
            pl.BlockSpec((blocks, c_out, 1), lambda b, g: (0, 0, 0)),
        ],
        out_specs=pl.BlockSpec((None, c_out, tg), lambda b, g: (b, 0, g)),
        compiler_params=pltpu.CompilerParams(
            dimension_semantics=("parallel", "parallel")),
    )(x, w0, sh0, w1, sh1, w2, sh2)

    return out


# ------------------------- parameter construction -----------------------------

def build_folded_params(key, c_in, c_out, *, blocks=2, res_expansion=1.0, bias=True):
    """PyTorch-default init of Conv1d(k=1)+BN layers, folded to (bf16 weight, f32 shift)."""
    c_hid = int(c_out * res_expansion)

    def conv_bn(k, cin, cout, use_bias):
        kw, kb = jax.random.split(k)
        bound = 1.0 / (cin ** 0.5)
        W = jax.random.uniform(kw, (cout, cin), jnp.float32, -bound, bound)
        b = (jax.random.uniform(kb, (cout,), jnp.float32, -bound, bound)
             if use_bias else jnp.zeros((cout,), jnp.float32))
        gamma = jnp.ones((cout,), jnp.float32)      # BN affine at init
        beta = jnp.zeros((cout,), jnp.float32)
        mean = jnp.zeros((cout,), jnp.float32)      # inference-mode running stats
        var = jnp.ones((cout,), jnp.float32)
        sc = gamma / jnp.sqrt(var + BN_EPS)
        w_folded = sc[:, None] * W                  # fold BN scale into the weight
        shift = (b - mean) * sc + beta
        return w_folded, shift

    keys = jax.random.split(key, 1 + 2 * blocks)
    w0, sh0 = conv_bn(keys[0], c_in, c_out, bias)
    w1s, sh1s, w2s, sh2s = [], [], [], []
    for i in range(blocks):
        wa, sha = conv_bn(keys[1 + 2 * i], c_out, c_hid, bias)
        wb, shb = conv_bn(keys[2 + 2 * i], c_hid, c_out, bias)
        w1s.append(wa); sh1s.append(sha); w2s.append(wb); sh2s.append(shb)

    bf = lambda w: w.astype(jnp.bfloat16)
    return (bf(w0), sh0[:, None],
            bf(jnp.stack(w1s)), jnp.stack(sh1s)[:, :, None],
            bf(jnp.stack(w2s)), jnp.stack(sh2s)[:, :, None])


# --------------------------- reference (pure JAX) ------------------------------

def ref_forward(x, params, *, activation="relu", out_dtype=jnp.bfloat16):
    """Mirrors the kernel math (bf16 at the dot boundary / residual, f32 elsewhere)."""
    w0, sh0, w1, sh1, w2, sh2 = params
    act = _make_act(activation)

    def dot(w, h_bf16):  # w: (o, c) bf16, h_bf16: [B, c, G] bf16
        return jnp.einsum("oc,bcg->bog", w, h_bf16,
                          preferred_element_type=jnp.float32)

    h32 = act(dot(w0, x.astype(jnp.bfloat16)) + sh0[None])
    for i in range(w1.shape[0]):
        h = h32.astype(jnp.bfloat16)
        r = act(dot(w1[i], h) + sh1[i][None])
        r = dot(w2[i], r.astype(jnp.bfloat16)) + sh2[i][None]
        h32 = act(r + h.astype(jnp.float32))
    return h32.astype(out_dtype)


# ----------------------------------- main --------------------------------------

if __name__ == "__main__":
    B, C_IN, C_OUT, G = 2, 32, 32, 512
    BLOCKS = 2

    key = jax.random.PRNGKey(0)
    kx, kx2, kp = jax.random.split(key, 3)
    x = jax.random.normal(kx, (B, C_IN, G), jnp.float32)
    params = build_folded_params(kp, C_IN, C_OUT, blocks=BLOCKS,
                                 res_expansion=1.0, bias=True)

    def check(out, ref, tol=2e-2):
        o = out.astype(jnp.float32)
        r = ref.astype(jnp.float32)
        assert jnp.allclose(o, r, atol=tol, rtol=tol), float(jnp.max(jnp.abs(o - r)))

    # 1) Tiled, evenly divisible path: tile_g=256 -> grid (2, 2), bf16 output.
    out = global_extraction_forward(x, params, activation="relu", tile_g=256)
    out = jax.block_until_ready(out)
    assert out.shape == (B, C_OUT, G) and out.dtype == jnp.bfloat16
    check(out, ref_forward(x, params, activation="relu"))

    # 2) Ragged last block (G=320, tile 256 -> blocks of 256 + 64), no pad/slice,
    #    leakyrelu activation, f32 output requested.
    G2 = 320
    x2 = jax.random.normal(kx2, (B, C_IN, G2), jnp.float32)
    out2 = global_extraction_forward(x2, params, activation="leakyrelu",
                                     tile_g=256, out_dtype=jnp.float32)
    out2 = jax.block_until_ready(out2)
    assert out2.shape == (B, C_OUT, G2) and out2.dtype == jnp.float32
    check(out2, ref_forward(x2, params, activation="leakyrelu",
                            out_dtype=jnp.float32))

    # 3) Single-tile fast path with the default (large) tile_g.
    out3 = global_extraction_forward(x, params, activation="relu")
    out3 = jax.block_until_ready(out3)
    assert out3.shape == (B, C_OUT, G) and out3.dtype == jnp.bfloat16
    check(out3, ref_forward(x, params, activation="relu"))

    print("KERNEL_OK")
</pallas_src>

<mosaic_0001>
module attributes {stable_mosaic.version = 11 : i64} {
  func.func @global_extraction_kernel(%arg0: i32, %arg1: i32, %arg2: memref<1x32x256xf32, #tpu.memory_space<vmem>>, %arg3: memref<32x32xbf16, #tpu.memory_space<vmem>>, %arg4: memref<32x1xf32, #tpu.memory_space<vmem>>, %arg5: memref<2x32x32xbf16, #tpu.memory_space<vmem>>, %arg6: memref<2x32x1xf32, #tpu.memory_space<vmem>>, %arg7: memref<2x32x32xbf16, #tpu.memory_space<vmem>>, %arg8: memref<2x32x1xf32, #tpu.memory_space<vmem>>, %arg9: memref<1x32x256xbf16, #tpu.memory_space<vmem>>) attributes {dimension_semantics = [#tpu.dimension_semantics<parallel>, #tpu.dimension_semantics<parallel>], iteration_bounds = array<i64: 2, 2>, scalar_prefetch = 0 : i64, scratch_operands = 0 : i64, tpu.core_type = #tpu.core_type<tc>, window_params = [{transform_indices = @transform_0, window_bounds = array<i64: 1, 32, 256>}, {pipeline_mode = #tpu.pipeline_mode<synchronous>, transform_indices = @transform_1, window_bounds = array<i64: 32, 32>}, {pipeline_mode = #tpu.pipeline_mode<synchronous>, transform_indices = @transform_2, window_bounds = array<i64: 32, 1>}, {pipeline_mode = #tpu.pipeline_mode<synchronous>, transform_indices = @transform_3, window_bounds = array<i64: 2, 32, 32>}, {pipeline_mode = #tpu.pipeline_mode<synchronous>, transform_indices = @transform_4, window_bounds = array<i64: 2, 32, 1>}, {pipeline_mode = #tpu.pipeline_mode<synchronous>, transform_indices = @transform_5, window_bounds = array<i64: 2, 32, 32>}, {pipeline_mode = #tpu.pipeline_mode<synchronous>, transform_indices = @transform_6, window_bounds = array<i64: 2, 32, 1>}, {transform_indices = @transform_7, window_bounds = array<i64: 1, 32, 256>}]} {
    %c0 = arith.constant 0 : index
    %c0_0 = arith.constant 0 : index
    %c0_1 = arith.constant 0 : index
    %0 = vector.load %arg2[%c0, %c0_0, %c0_1] : memref<1x32x256xf32, #tpu.memory_space<vmem>>, vector<1x32x256xf32>
    %1 = vector.shape_cast %0 : vector<1x32x256xf32> to vector<32x256xf32>
    %2 = arith.truncf %1 : vector<32x256xf32> to vector<32x256xbf16>
    %c0_2 = arith.constant 0 : index
    %c0_3 = arith.constant 0 : index
    %3 = vector.load %arg3[%c0_2, %c0_3] : memref<32x32xbf16, #tpu.memory_space<vmem>>, vector<32x32xbf16>
    %cst = arith.constant dense<0.000000e+00> : vector<32x256xf32>
    %4 = tpu.matmul %3, %2, %cst {dimension_numbers = #tpu.dot_dimension_numbers<[1], [0], [0], [1], [0, 0, 1, 1], [], []>} : vector<32x32xbf16>, vector<32x256xbf16>, vector<32x256xf32> -> vector<32x256xf32>
    %c0_4 = arith.constant 0 : index
    %c0_5 = arith.constant 0 : index
    %5 = vector.load %arg4[%c0_4, %c0_5] : memref<32x1xf32, #tpu.memory_space<vmem>>, vector<32x1xf32>
    %6 = vector.broadcast %5 : vector<32x1xf32> to vector<32x256xf32>
    %7 = arith.addf %4, %6 : vector<32x256xf32>
    %cst_6 = arith.constant 0.000000e+00 : f32
    %8 = vector.broadcast %cst_6 : f32 to vector<32x256xf32>
    %9 = arith.maximumf %7, %8 : vector<32x256xf32>
    %10 = arith.truncf %9 : vector<32x256xf32> to vector<32x256xbf16>
    %c0_7 = arith.constant 0 : index
    %c0_8 = arith.constant 0 : index
    %c0_9 = arith.constant 0 : index
    %11 = vector.load %arg5[%c0_7, %c0_8, %c0_9] : memref<2x32x32xbf16, #tpu.memory_space<vmem>>, vector<1x32x32xbf16>
    %12 = vector.shape_cast %11 : vector<1x32x32xbf16> to vector<32x32xbf16>
    %cst_10 = arith.constant dense<0.000000e+00> : vector<32x256xf32>
    %13 = tpu.matmul %12, %10, %cst_10 {dimension_numbers = #tpu.dot_dimension_numbers<[1], [0], [0], [1], [0, 0, 1, 1], [], []>} : vector<32x32xbf16>, vector<32x256xbf16>, vector<32x256xf32> -> vector<32x256xf32>
    %c0_11 = arith.constant 0 : index
    %c0_12 = arith.constant 0 : index
    %c0_13 = arith.constant 0 : index
    %14 = vector.load %arg6[%c0_11, %c0_12, %c0_13] : memref<2x32x1xf32, #tpu.memory_space<vmem>>, vector<1x32x1xf32>
    %15 = vector.shape_cast %14 : vector<1x32x1xf32> to vector<32x1xf32>
    %16 = vector.broadcast %15 : vector<32x1xf32> to vector<32x256xf32>
    %17 = arith.addf %13, %16 : vector<32x256xf32>
    %cst_14 = arith.constant 0.000000e+00 : f32
    %18 = vector.broadcast %cst_14 : f32 to vector<32x256xf32>
    %19 = arith.maximumf %17, %18 : vector<32x256xf32>
    %c0_15 = arith.constant 0 : index
    %c0_16 = arith.constant 0 : index
    %c0_17 = arith.constant 0 : index
    %20 = vector.load %arg7[%c0_15, %c0_16, %c0_17] : memref<2x32x32xbf16, #tpu.memory_space<vmem>>, vector<1x32x32xbf16>
    %21 = vector.shape_cast %20 : vector<1x32x32xbf16> to vector<32x32xbf16>
    %22 = arith.truncf %19 : vector<32x256xf32> to vector<32x256xbf16>
    %cst_18 = arith.constant dense<0.000000e+00> : vector<32x256xf32>
    %23 = tpu.matmul %21, %22, %cst_18 {dimension_numbers = #tpu.dot_dimension_numbers<[1], [0], [0], [1], [0, 0, 1, 1], [], []>} : vector<32x32xbf16>, vector<32x256xbf16>, vector<32x256xf32> -> vector<32x256xf32>
    %c0_19 = arith.constant 0 : index
    %c0_20 = arith.constant 0 : index
    %c0_21 = arith.constant 0 : index
    %24 = vector.load %arg8[%c0_19, %c0_20, %c0_21] : memref<2x32x1xf32, #tpu.memory_space<vmem>>, vector<1x32x1xf32>
    %25 = vector.shape_cast %24 : vector<1x32x1xf32> to vector<32x1xf32>
    %26 = vector.broadcast %25 : vector<32x1xf32> to vector<32x256xf32>
    %27 = arith.addf %23, %26 : vector<32x256xf32>
    %28 = arith.extf %10 : vector<32x256xbf16> to vector<32x256xf32>
    %29 = arith.addf %27, %28 : vector<32x256xf32>
    %cst_22 = arith.constant 0.000000e+00 : f32
    %30 = vector.broadcast %cst_22 : f32 to vector<32x256xf32>
    %31 = arith.maximumf %29, %30 : vector<32x256xf32>
    %32 = arith.truncf %31 : vector<32x256xf32> to vector<32x256xbf16>
    %c1 = arith.constant 1 : index
    %c0_23 = arith.constant 0 : index
    %c0_24 = arith.constant 0 : index
    %33 = vector.load %arg5[%c1, %c0_23, %c0_24] : memref<2x32x32xbf16, #tpu.memory_space<vmem>>, vector<1x32x32xbf16>
    %34 = vector.shape_cast %33 : vector<1x32x32xbf16> to vector<32x32xbf16>
    %cst_25 = arith.constant dense<0.000000e+00> : vector<32x256xf32>
    %35 = tpu.matmul %34, %32, %cst_25 {dimension_numbers = #tpu.dot_dimension_numbers<[1], [0], [0], [1], [0, 0, 1, 1], [], []>} : vector<32x32xbf16>, vector<32x256xbf16>, vector<32x256xf32> -> vector<32x256xf32>
    %c1_26 = arith.constant 1 : index
    %c0_27 = arith.constant 0 : index
    %c0_28 = arith.constant 0 : index
    %36 = vector.load %arg6[%c1_26, %c0_27, %c0_28] : memref<2x32x1xf32, #tpu.memory_space<vmem>>, vector<1x32x1xf32>
    %37 = vector.shape_cast %36 : vector<1x32x1xf32> to vector<32x1xf32>
    %38 = vector.broadcast %37 : vector<32x1xf32> to vector<32x256xf32>
    %39 = arith.addf %35, %38 : vector<32x256xf32>
    %cst_29 = arith.constant 0.000000e+00 : f32
    %40 = vector.broadcast %cst_29 : f32 to vector<32x256xf32>
    %41 = arith.maximumf %39, %40 : vector<32x256xf32>
    %c1_30 = arith.constant 1 : index
    %c0_31 = arith.constant 0 : index
    %c0_32 = arith.constant 0 : index
    %42 = vector.load %arg7[%c1_30, %c0_31, %c0_32] : memref<2x32x32xbf16, #tpu.memory_space<vmem>>, vector<1x32x32xbf16>
    %43 = vector.shape_cast %42 : vector<1x32x32xbf16> to vector<32x32xbf16>
    %44 = arith.truncf %41 : vector<32x256xf32> to vector<32x256xbf16>
    %cst_33 = arith.constant dense<0.000000e+00> : vector<32x256xf32>
    %45 = tpu.matmul %43, %44, %cst_33 {dimension_numbers = #tpu.dot_dimension_numbers<[1], [0], [0], [1], [0, 0, 1, 1], [], []>} : vector<32x32xbf16>, vector<32x256xbf16>, vector<32x256xf32> -> vector<32x256xf32>
    %c1_34 = arith.constant 1 : index
    %c0_35 = arith.constant 0 : index
    %c0_36 = arith.constant 0 : index
    %46 = vector.load %arg8[%c1_34, %c0_35, %c0_36] : memref<2x32x1xf32, #tpu.memory_space<vmem>>, vector<1x32x1xf32>
    %47 = vector.shape_cast %46 : vector<1x32x1xf32> to vector<32x1xf32>
    %48 = vector.broadcast %47 : vector<32x1xf32> to vector<32x256xf32>
    %49 = arith.addf %45, %48 : vector<32x256xf32>
    %50 = arith.extf %32 : vector<32x256xbf16> to vector<32x256xf32>
    %51 = arith.addf %49, %50 : vector<32x256xf32>
    %cst_37 = arith.constant 0.000000e+00 : f32
    %52 = vector.broadcast %cst_37 : f32 to vector<32x256xf32>
    %53 = arith.maximumf %51, %52 : vector<32x256xf32>
    %54 = arith.truncf %53 : vector<32x256xf32> to vector<32x256xbf16>
    %c0_38 = arith.constant 0 : index
    %c0_39 = arith.constant 0 : index
    %c0_40 = arith.constant 0 : index
    %55 = vector.load %arg9[%c0_38, %c0_39, %c0_40] : memref<1x32x256xbf16, #tpu.memory_space<vmem>>, vector<1x32x256xbf16>
    %56 = vector.shape_cast %55 : vector<1x32x256xbf16> to vector<32x256xbf16>
    %57 = vector.shape_cast %54 : vector<32x256xbf16> to vector<1x32x256xbf16>
    tpu.vector_store %arg9[%c0_38, %c0_39, %c0_40], %57 {strides = array<i32>} : memref<1x32x256xbf16, #tpu.memory_space<vmem>>, vector<1x32x256xbf16>,
    return
  }
  func.func @transform_0(%arg0: i32, %arg1: i32) -> (i32, i32, i32) {
    %c0_i32 = arith.constant 0 : i32
    %c0_i32_0 = arith.constant 0 : i32
    return %arg0, %c0_i32, %arg1 : i32, i32, i32
  }
  func.func @transform_1(%arg0: i32, %arg1: i32) -> (i32, i32) {
    %c0_i32 = arith.constant 0 : i32
    %c0_i32_0 = arith.constant 0 : i32
    %c0_i32_1 = arith.constant 0 : i32
    return %c0_i32, %c0_i32_0 : i32, i32
  }
  func.func @transform_2(%arg0: i32, %arg1: i32) -> (i32, i32) {
    %c0_i32 = arith.constant 0 : i32
    %c0_i32_0 = arith.constant 0 : i32
    %c0_i32_1 = arith.constant 0 : i32
    return %c0_i32, %c0_i32_0 : i32, i32
  }
  func.func @transform_3(%arg0: i32, %arg1: i32) -> (i32, i32, i32) {
    %c0_i32 = arith.constant 0 : i32
    %c0_i32_0 = arith.constant 0 : i32
    %c0_i32_1 = arith.constant 0 : i32
    %c0_i32_2 = arith.constant 0 : i32
    return %c0_i32, %c0_i32_0, %c0_i32_1 : i32, i32, i32
  }
  func.func @transform_4(%arg0: i32, %arg1: i32) -> (i32, i32, i32) {
    %c0_i32 = arith.constant 0 : i32
    %c0_i32_0 = arith.constant 0 : i32
    %c0_i32_1 = arith.constant 0 : i32
    %c0_i32_2 = arith.constant 0 : i32
    return %c0_i32, %c0_i32_0, %c0_i32_1 : i32, i32, i32
  }
  func.func @transform_5(%arg0: i32, %arg1: i32) -> (i32, i32, i32) {
    %c0_i32 = arith.constant 0 : i32
    %c0_i32_0 = arith.constant 0 : i32
    %c0_i32_1 = arith.constant 0 : i32
    %c0_i32_2 = arith.constant 0 : i32
    return %c0_i32, %c0_i32_0, %c0_i32_1 : i32, i32, i32
  }
  func.func @transform_6(%arg0: i32, %arg1: i32) -> (i32, i32, i32) {
    %c0_i32 = arith.constant 0 : i32
    %c0_i32_0 = arith.constant 0 : i32
    %c0_i32_1 = arith.constant 0 : i32
    %c0_i32_2 = arith.constant 0 : i32
    return %c0_i32, %c0_i32_0, %c0_i32_1 : i32, i32, i32
  }
  func.func @transform_7(%arg0: i32, %arg1: i32) -> (i32, i32, i32) {
    %c0_i32 = arith.constant 0 : i32
    %c0_i32_0 = arith.constant 0 : i32
    return %arg0, %c0_i32, %arg1 : i32, i32, i32
  }
}

</mosaic_0001>

<llo_original>
// kernel: tpu_custom_call.1
$region0: #{tpu_custom_call.1}
  #allocation0 [shape = 'u32[]', space=smem, size = 0x4, offset = 0x4, fixed_abs, tag = 'smem constant byte address 0x4 - core index']
  #allocation1 [shape = 'u32[144,128]{1,0:T(1,128)}', space=vmem, size = 0x12000, scoped, tag = 'internal scratch']
  %s0 = inlined_call_operand.hbm [shape: f32[2,32,512], index: 0, kind: input, shape index: {}]
  %s1 = inlined_call_operand.vmem [shape: bf16[32,32], index: 1, kind: input, shape index: {}]
  %s2 = inlined_call_operand.vmem [shape: f32[32,1], index: 2, kind: input, shape index: {}]
  %s3 = inlined_call_operand.vmem [shape: bf16[2,32,32], index: 3, kind: input, shape index: {}]
  %s4 = inlined_call_operand.vmem [shape: f32[2,32,1], index: 4, kind: input, shape index: {}]
  %s5 = inlined_call_operand.vmem [shape: bf16[2,32,32], index: 5, kind: input, shape index: {}]
  %s6 = inlined_call_operand.vmem [shape: f32[2,32,1], index: 6, kind: input, shape index: {}]
  %s7 = inlined_call_operand.hbm [shape: bf16[2,32,512], index: 7, kind: output, shape index: {}]
  %s8 = sld [smem:[#allocation0]]
  $region65: #{tpu_custom_call.1} parent=0
    _
  %s10 = ssub.s32 1, %s8
  %s11 = scalar_select 0, %s10, %s8
  $region1: #{tpu_custom_call.1} parent=0
    #allocation2 [shape = 'u8[65536]{0}', space=vmem, size = 0x10000, scoped, tag = 'input window, operand 0']
    #allocation3 [shape = 's32[2]{0}', space=sflag, size = 0x8, scoped, tag = 'scoped memory for tpu_custom_call.1']
    #allocation4 [shape = 's32[2]{0}', space=sflag, size = 0x8, scoped, tag = 'scoped memory for tpu_custom_call.1']
    #allocation5 [shape = 'u8[32768]{0}', space=vmem, size = 0x8000, scoped, tag = 'output window, operand 0']
    %12 = vsyncpa [#allocation3], 0
    %s13 = scalar_lea.sflag [#allocation3], 1
    %14 = vsyncpa %s13, 0
    %15 = vsyncpa [#allocation4], 0
    %s16 = scalar_lea.sflag [#allocation4], 1
    %17 = vsyncpa %s16, 0
    loop: start=0, step=1, limit=6
    $region2: #{tpu_custom_call.1} parent=1 // loop_pre_header
      _
    $region3: #{tpu_custom_call.1} parent=1 // loop_header
      %s19 = sphi 0, %s23
      %p20 = scmp.ge.s32.totalorder %s19, 6
      %s26 = sphi 0, %s38
      %s27 = sphi 0, %s34
      %s28 = sphi 0, %s26
      %s29 = sphi 0, %s27
      %s30 = sphi 0, %s28
      %s31 = sphi 0, %s29
      %s43 = sphi 0, %s45
      %s46 = sphi 0, %s43
      %s47 = sphi 0, %s46
      %s63 = sphi 0, %s47
      %s67 = sphi 0, %s67
      %s69 = sphi 0, %s67
      %s70 = sphi 0, %s69
      %s84 = sphi 0, %s70
      %s88 = sphi 0, %s88
      %s90 = sphi 0, %s88
      %s91 = sphi 0, %s90
      %s105 = sphi 0, %s91
      %s109 = sphi 0, %s109
      %s111 = sphi 0, %s109
      %s112 = sphi 0, %s111
      %s126 = sphi 0, %s112
      %s130 = sphi 0, %s130
      %s132 = sphi 0, %s130
      %s133 = sphi 0, %s132
      %s147 = sphi 0, %s133
      %s151 = sphi 0, %s151
      %s153 = sphi 0, %s151
      %s154 = sphi 0, %s153
      %s168 = sphi 0, %s154
      %s172 = sphi 0, %s172
      %s174 = sphi 0, %s172
      %s175 = sphi 0, %s174
      %s189 = sphi 0, %s175
      %s197 = sphi 0, %s199
      %s200 = sphi 0, %s197
      %s201 = sphi 0, %s200
      %s217 = sphi 0, %s201
    $region4: #{tpu_custom_call.1} parent=1 // loop_header_branch
      %22 = sbr.rel (%p20) target = $region8
    $region5: #{tpu_custom_call.1} parent=1 // loop_body
      %s24 = ssub.s32 %s19, 1
      %s25 = ssub.s32 %s19, 2
      %s32 = sadd.s32 1, %s27
      %p33 = scmp.ge.s32.totalorder %s32, 2
      %s34 = scalar_select %p33, 0, %s32
      %s35 = sadd.s32 1, %s26
      %s36 = scalar_select %p33, %s35, %s26
      %p37 = scmp.ge.s32.totalorder %s36, 2
      %s38 = scalar_select %p37, 0, %s36
      %s39 = ssub.s32 %s26, %s38
      %s40 = ssub.s32 %s27, %s34
      %s41 = sor.u32 %s39, %s40
      %p42 = scmp.eq.s32.totalorder %s41, 0
      %s44 = sadd.s32 %s43, 1
      %s45 = scalar_select %p42, %s43, %s44
      %p48 = pneg %p42
      %p49 = scmp.eq.s32.totalorder %s19, 3
      %p50 = por %p48, %p49
      %p51 = scmp.ne.s32.totalorder %s43, %s46
      %p52 = scmp.eq.s32.totalorder %s19, 0
      %p53 = por %p51, %p52
      %p54 = scmp.ne.s32.totalorder %s43, %s46
      %p55 = scmp.eq.s32.totalorder %s24, 3
      %p56 = por %p54, %p55
      %p57 = scmp.ne.s32.totalorder %s46, %s47
      %p58 = scmp.eq.s32.totalorder %s24, 0
      %p59 = por %p57, %p58
      %p60 = scmp.ne.s32.totalorder %s46, %s47
      %p61 = scmp.eq.s32.totalorder %s25, 3
      %p62 = por %p60, %p61
      %p64 = scmp.ne.s32.totalorder %s47, %s63
      %p65 = scmp.eq.s32.totalorder %s25, 0
      %p66 = por %p64, %p65
      %s68 = sadd.s32 %s67, 1
      %p71 = scmp.eq.s32.totalorder %s19, 3
      %p72 = scmp.ne.s32.totalorder %s67, %s69
      %p73 = scmp.eq.s32.totalorder %s19, 0
      %p74 = por %p72, %p73
      %p75 = scmp.ne.s32.totalorder %s67, %s69
      %p76 = scmp.eq.s32.totalorder %s24, 3
      %p77 = por %p75, %p76
      %p78 = scmp.ne.s32.totalorder %s69, %s70
      %p79 = scmp.eq.s32.totalorder %s24, 0
      %p80 = por %p78, %p79
      %p81 = scmp.ne.s32.totalorder %s69, %s70
      %p82 = scmp.eq.s32.totalorder %s25, 3
      %p83 = por %p81, %p82
      %p85 = scmp.ne.s32.totalorder %s70, %s84
      %p86 = scmp.eq.s32.totalorder %s25, 0
      %p87 = por %p85, %p86
      %s89 = sadd.s32 %s88, 1
      %p92 = scmp.eq.s32.totalorder %s19, 3
      %p93 = scmp.ne.s32.totalorder %s88, %s90
      %p94 = scmp.eq.s32.totalorder %s19, 0
      %p95 = por %p93, %p94
      %p96 = scmp.ne.s32.totalorder %s88, %s90
      %p97 = scmp.eq.s32.totalorder %s24, 3
      %p98 = por %p96, %p97
      %p99 = scmp.ne.s32.totalorder %s90, %s91
      %p100 = scmp.eq.s32.totalorder %s24, 0
      %p101 = por %p99, %p100
      %p102 = scmp.ne.s32.totalorder %s90, %s91
      %p103 = scmp.eq.s32.totalorder %s25, 3
      %p104 = por %p102, %p103
      %p106 = scmp.ne.s32.totalorder %s91, %s105
      %p107 = scmp.eq.s32.totalorder %s25, 0
      %p108 = por %p106, %p107
      %s110 = sadd.s32 %s109, 1
      %p113 = scmp.eq.s32.totalorder %s19, 3
      %p114 = scmp.ne.s32.totalorder %s109, %s111
      %p115 = scmp.eq.s32.totalorder %s19, 0
      %p116 = por %p114, %p115
      %p117 = scmp.ne.s32.totalorder %s109, %s111
      %p118 = scmp.eq.s32.totalorder %s24, 3
      %p119 = por %p117, %p118
      %p120 = scmp.ne.s32.totalorder %s111, %s112
      %p121 = scmp.eq.s32.totalorder %s24, 0
      %p122 = por %p120, %p121
      %p123 = scmp.ne.s32.totalorder %s111, %s112
      %p124 = scmp.eq.s32.totalorder %s25, 3
      %p125 = por %p123, %p124
      %p127 = scmp.ne.s32.totalorder %s112, %s126
      %p128 = scmp.eq.s32.totalorder %s25, 0
      %p129 = por %p127, %p128
      %s131 = sadd.s32 %s130, 1
      %p134 = scmp.eq.s32.totalorder %s19, 3
      %p135 = scmp.ne.s32.totalorder %s130, %s132
      %p136 = scmp.eq.s32.totalorder %s19, 0
      %p137 = por %p135, %p136
      %p138 = scmp.ne.s32.totalorder %s130, %s132
      %p139 = scmp.eq.s32.totalorder %s24, 3
      %p140 = por %p138, %p139
      %p141 = scmp.ne.s32.totalorder %s132, %s133
      %p142 = scmp.eq.s32.totalorder %s24, 0
      %p143 = por %p141, %p142
      %p144 = scmp.ne.s32.totalorder %s132, %s133
      %p145 = scmp.eq.s32.totalorder %s25, 3
      %p146 = por %p144, %p145
      %p148 = scmp.ne.s32.totalorder %s133, %s147
      %p149 = scmp.eq.s32.totalorder %s25, 0
      %p150 = por %p148, %p149
      %s152 = sadd.s32 %s151, 1
      %p155 = scmp.eq.s32.totalorder %s19, 3
      %p156 = scmp.ne.s32.totalorder %s151, %s153
      %p157 = scmp.eq.s32.totalorder %s19, 0
      %p158 = por %p156, %p157
      %p159 = scmp.ne.s32.totalorder %s151, %s153
      %p160 = scmp.eq.s32.totalorder %s24, 3
      %p161 = por %p159, %p160
      %p162 = scmp.ne.s32.totalorder %s153, %s154
      %p163 = scmp.eq.s32.totalorder %s24, 0
      %p164 = por %p162, %p163
      %p165 = scmp.ne.s32.totalorder %s153, %s154
      %p166 = scmp.eq.s32.totalorder %s25, 3
      %p167 = por %p165, %p166
      %p169 = scmp.ne.s32.totalorder %s154, %s168
      %p170 = scmp.eq.s32.totalorder %s25, 0
      %p171 = por %p169, %p170
      %s173 = sadd.s32 %s172, 1
      %p176 = scmp.eq.s32.totalorder %s19, 3
      %p177 = scmp.ne.s32.totalorder %s172, %s174
      %p178 = scmp.eq.s32.totalorder %s19, 0
      %p179 = por %p177, %p178
      %p180 = scmp.ne.s32.totalorder %s172, %s174
      %p181 = scmp.eq.s32.totalorder %s24, 3
      %p182 = por %p180, %p181
      %p183 = scmp.ne.s32.totalorder %s174, %s175
      %p184 = scmp.eq.s32.totalorder %s24, 0
      %p185 = por %p183, %p184
      %p186 = scmp.ne.s32.totalorder %s174, %s175
      %p187 = scmp.eq.s32.totalorder %s25, 3
      %p188 = por %p186, %p187
      %p190 = scmp.ne.s32.totalorder %s175, %s189
      %p191 = scmp.eq.s32.totalorder %s25, 0
      %p192 = por %p190, %p191
      %s193 = ssub.s32 %s26, %s38
      %s194 = ssub.s32 %s27, %s34
      %s195 = sor.u32 %s193, %s194
      %p196 = scmp.eq.s32.totalorder %s195, 0
      %s198 = sadd.s32 %s197, 1
      %s199 = scalar_select %p196, %s197, %s198
      %p202 = pneg %p196
      %p203 = scmp.eq.s32.totalorder %s19, 3
      %p204 = por %p202, %p203
      %p205 = scmp.ne.s32.totalorder %s197, %s200
      %p206 = scmp.eq.s32.totalorder %s19, 0
      %p207 = por %p205, %p206
      %p208 = scmp.ne.s32.totalorder %s197, %s200
      %p209 = scmp.eq.s32.totalorder %s24, 3
      %p210 = por %p208, %p209
      %p211 = scmp.ne.s32.totalorder %s200, %s201
      %p212 = scmp.eq.s32.totalorder %s24, 0
      %p213 = por %p211, %p212
      %p214 = scmp.ne.s32.totalorder %s200, %s201
      %p215 = scmp.eq.s32.totalorder %s25, 3
      %p216 = por %p214, %p215
      %p218 = scmp.ne.s32.totalorder %s201, %s217
      %p219 = scmp.eq.s32.totalorder %s25, 0
      %p220 = por %p218, %p219
      %p221 = scmp.le.s32.totalorder 1, %s19
      %p222 = scmp.lt.s32.totalorder %s19, 5
      %p223 = pnand %p221, %p222
      %p224 = pneg %p223
      // Predicated region
      $region9: #{tpu_custom_call.1} parent=5 // pred_check
        _
      $region10: #{tpu_custom_call.1} parent=5 // pred_check_branch
        %226 = sbr.rel (%p223) target = $region12
      $region11: #{tpu_custom_call.1} parent=5 // pred_region
        %s227 = ssub.s32 %s19, 1
        // Predicated region
        $region13: #{tpu_custom_call.1} parent=11 // pred_check
          %p228 = pneg %p80
        $region14: #{tpu_custom_call.1} parent=11 // pred_check_branch
          %230 = sbr.rel (%p228) target = $region16
        $region15: #{tpu_custom_call.1} parent=11 // pred_region
          _
        $region16: #{tpu_custom_call.1} parent=11 // pred_fallthru
          _
        // Predicated region
        $region17: #{tpu_custom_call.1} parent=11 // pred_check
          %p231 = pneg %p101
        $region18: #{tpu_custom_call.1} parent=11 // pred_check_branch
          %233 = sbr.rel (%p231) target = $region20
        $region19: #{tpu_custom_call.1} parent=11 // pred_region
          _
        $region20: #{tpu_custom_call.1} parent=11 // pred_fallthru
          _
        // Predicated region
        $region21: #{tpu_custom_call.1} parent=11 // pred_check
          %p234 = pneg %p122
        $region22: #{tpu_custom_call.1} parent=11 // pred_check_branch
          %236 = sbr.rel (%p234) target = $region24
        $region23: #{tpu_custom_call.1} parent=11 // pred_region
          _
        $region24: #{tpu_custom_call.1} parent=11 // pred_fallthru
          _
        // Predicated region
        $region25: #{tpu_custom_call.1} parent=11 // pred_check
          %p237 = pneg %p143
        $region26: #{tpu_custom_call.1} parent=11 // pred_check_branch
          %239 = sbr.rel (%p237) target = $region28
        $region27: #{tpu_custom_call.1} parent=11 // pred_region
          _
        $region28: #{tpu_custom_call.1} parent=11 // pred_fallthru
          _
        // Predicated region
        $region29: #{tpu_custom_call.1} parent=11 // pred_check
          %p240 = pneg %p164
        $region30: #{tpu_custom_call.1} parent=11 // pred_check_branch
          %242 = sbr.rel (%p240) target = $region32
        $region31: #{tpu_custom_call.1} parent=11 // pred_region
          _
        $region32: #{tpu_custom_call.1} parent=11 // pred_fallthru
          _
        // Predicated region
        $region33: #{tpu_custom_call.1} parent=11 // pred_check
          %p243 = pneg %p185
        $region34: #{tpu_custom_call.1} parent=11 // pred_check_branch
          %245 = sbr.rel (%p243) target = $region36
        $region35: #{tpu_custom_call.1} parent=11 // pred_region
          _
        $region36: #{tpu_custom_call.1} parent=11 // pred_fallthru
          _
      $region12: #{tpu_custom_call.1} parent=5 // pred_fallthru
        _
      %p246 = scmp.lt.s32.totalorder %s19, 4
      // Predicated region
      $region37: #{tpu_custom_call.1} parent=5 // pred_check
        %p247 = pneg %p246
      $region38: #{tpu_custom_call.1} parent=5 // pred_check_branch
        %249 = sbr.rel (%p247) target = $region40
      $region39: #{tpu_custom_call.1} parent=5 // pred_region
        // Predicated region
        $region41: #{tpu_custom_call.1} parent=39 // pred_check
          %p250 = pneg %p53
        $region42: #{tpu_custom_call.1} parent=39 // pred_check_branch
          %252 = sbr.rel (%p250) target = $region44
        $region43: #{tpu_custom_call.1} parent=39 // pred_region
          %s253 = sand.u32 %s43, 1
          %s254 = scalar_lea.sflag [#allocation3], %s253
          %s255 = sand.u32 %s43, 1
          %s256 = smul.addr %s255, 64
          %s257 = scalar_lea.vmem [#allocation2], %s256
          %s258 = smul.u32 2, %s27
          %s260 = ssub.s32 1024, 1024
          %261 = vsyncadd %s254, %s260
          %s262 = smul.addr %s26, 16
          %s263 = sadd.s32 %s258, %s262
          %s264 = smul.addr %s263, 128
          %s265 = scalar_lea.hbm %s0, %s264
          %s266 = sshll.u32 %s257, 4
          %s267 = int_to_ptr.vmem [resolvable:$true] %s266
          %272 = dma.hbm_to_vmem [thread:$0]  %s265, 1024, %s267, %s254, 512, 256, 16
        $region44: #{tpu_custom_call.1} parent=39 // pred_fallthru
          _
      $region40: #{tpu_custom_call.1} parent=5 // pred_fallthru
        _
      %p273 = scmp.le.s32.totalorder 1, %s19
      %p274 = scmp.lt.s32.totalorder %s19, 5
      %p275 = pnand %p273, %p274
      %p276 = pneg %p275
      // Predicated region
      $region45: #{tpu_custom_call.1} parent=5 // pred_check
        _
      $region46: #{tpu_custom_call.1} parent=5 // pred_check_branch
        %278 = sbr.rel (%p275) target = $region48
      $region47: #{tpu_custom_call.1} parent=5 // pred_region
        %s279 = ssub.s32 %s19, 1
        %s280 = sand.u32 %s46, 1
        %s281 = scalar_lea.sflag [#allocation3], %s280
        %s282 = sand.u32 %s46, 1
        %s283 = smul.addr %s282, 64
        %s284 = scalar_lea.vmem [#allocation2], %s283
        // Predicated region
        $region49: #{tpu_custom_call.1} parent=47 // pred_check
          %p285 = pneg %p59
        $region50: #{tpu_custom_call.1} parent=47 // pred_check_branch
          %287 = sbr.rel (%p285) target = $region52
        $region51: #{tpu_custom_call.1} parent=47 // pred_region
          %288 = dma.done %s281, 1024
        $region52: #{tpu_custom_call.1} parent=47 // pred_fallthru
          _
        %s289 = sand.u32 %s46, 1
        %s290 = scalar_lea.sflag [#allocation3], %s289
        %s291 = sand.u32 %s46, 1
        %s292 = smul.addr %s291, 64
        %s293 = scalar_lea.vmem [#allocation2], %s292
        %p294 = pneg %p59
        %p295 = pneg %p56
        %p296 = pneg %p80
        %p297 = pneg %p77
        %p298 = pneg %p101
        %p299 = pneg %p98
        %p300 = pneg %p122
        %p301 = pneg %p119
        %p302 = pneg %p143
        %p303 = pneg %p140
        %p304 = pneg %p164
        %p305 = pneg %p161
        %p306 = pneg %p185
        %p307 = pneg %p182
        %p308 = pneg %p213
        %p309 = pneg %p210
        %s310 = sand.u32 %s200, 1
        %s311 = scalar_lea.sflag [#allocation4], %s310
        %s312 = sand.u32 %s200, 1
        %s313 = smul.addr %s312, 32
        %s314 = scalar_lea.vmem [#allocation5], %s313
        %s315 = smul.u32 2, %s29
        %s316 = smul.u32 2, %s29
        %v318 = vld [vmem:[%s284] sm:$0xff]
        %v319 = vld [vmem:[%s284 + $0x8] sm:$0xff]
        %v320 = vld [vmem:[%s284 + $0x10] sm:$0xff]
        %v321 = vld [vmem:[%s284 + $0x18] sm:$0xff]
        %v322 = vld [vmem:[%s284 + $0x20] sm:$0xff]
        %v323 = vld [vmem:[%s284 + $0x28] sm:$0xff]
        %v324 = vld [vmem:[%s284 + $0x30] sm:$0xff]
        %v325 = vld [vmem:[%s284 + $0x38] sm:$0xff]
        %v326 = vpack.c.bf16 %v320, %v318
        %v327 = vpack.c.bf16 %v321, %v319
        %v328 = vpack.c.bf16 %v324, %v322
        %v329 = vpack.c.bf16 %v325, %v323
        %v330 = vld [vmem:[%s1] sm:$0xf]
        %v331 = vld [vmem:[%s1 + $0x4] sm:$0xf]
        %v332 = vld [vmem:[%s1 + $0x8] sm:$0xf]
        %v333 = vld [vmem:[%s1 + $0xc] sm:$0xf]
        %v334 = vld [vmem:[%s2] sm:$0xff]
        %v335 = vld [vmem:[%s2 + $0x8] sm:$0xff]
        %v336 = vld [vmem:[%s2 + $0x10] sm:$0xff]
        %v337 = vld [vmem:[%s2 + $0x18] sm:$0xff]
        %339 = vset.pattern.permute.xlu0 0
        %340 = vperm.xlu0 %339, %v334
        %v341 = vpop.permute.xlu0 %340
        %344 = vset.pattern.permute.xlu0 0
        %345 = vperm.xlu0 %344, %v335
        %v346 = vpop.permute.xlu0 %345
        %349 = vset.pattern.permute.xlu0 0
        %350 = vperm.xlu0 %349, %v336
        %v351 = vpop.permute.xlu0 %350
        %354 = vset.pattern.permute.xlu0 0
        %355 = vperm.xlu0 %354, %v337
        %v356 = vpop.permute.xlu0 %355
        %v362 = vunpack.c.l.b16 %v330
        %v363 = vunpack.c.l.b16 %v331
        %v364 = vunpack.c.l.b16 %v332
        %v365 = vunpack.c.l.b16 %v333
        %v366 = vpack.c.b16 %v363, %v362
        %v367 = vpack.c.b16 %v365, %v364
        %vm368 = vcmask 261120
        %v370 = vsel %vm368, %v366, 0
        %v373 = vsel %vm368, %v367, 0
        %375 = vmatprep.subr.bf16.mxu0 0
        %376 = vmatpush1.bf16.msra.mxu0 0
        %377 = vmatprep.subr.bf16.mxu0 0
        %378 = vmatpush1.bf16.msra.mxu0 0
        %379 = vmatprep.subr.bf16.mxu0 0
        %380 = vmatpush1.bf16.msra.mxu0 0
        %381 = vmatprep.subr.bf16.mxu0 0
        %382 = vmatpush1.bf16.msra.mxu0 0
        %383 = vmatprep.subr.bf16.mxu0 0
        %384 = vmatpush1.bf16.msra.mxu0 0
        %385 = vmatprep.subr.bf16.mxu0 0
        %386 = vmatpush1.bf16.msra.mxu0 0
        %387 = vmatprep.subr.bf16.mxu0 %v329
        %388 = vmatpush1.bf16.msra.mxu0 %v328
        %389 = vmatprep.subr.bf16.mxu0 %v327
        %390 = vmatpush1.bf16.msra.mxu0 %v326
        %391 = vmatprep.subr.bf16.mxu0 0
        %392 = vmatpush2.bf16.msra.mxu0 0
        %393 = vmatprep.subr.bf16.mxu0 0
        %394 = vmatpush2.bf16.msra.mxu0 0
        %395 = vmatprep.subr.bf16.mxu0 0
        %396 = vmatpush2.bf16.msra.mxu0 0
        %397 = vmatprep.subr.bf16.mxu0 0
        %398 = vmatpush2.bf16.msra.mxu0 0
        %399 = vmatprep.subr.bf16.mxu0 0
        %400 = vmatpush2.bf16.msra.mxu0 0
        %401 = vmatprep.subr.bf16.mxu0 0
        %402 = vmatpush2.bf16.msra.mxu0 0
        %403 = vmatprep.subr.bf16.mxu0 0
        %404 = vmatpush2.bf16.msra.mxu0 0
        %405 = vmatprep.subr.bf16.mxu0 0
        %406 = vmatpush2.bf16.msra.mxu0 0
        %407 = vmatprep.mubr.bf16.mxu0 0
        %408 = vmatmul.mubr.bf16.gmra.mxu0 %v370
        %v409 = vpop.f32.mrf.mxu0
        %v410 = vadd.f32 %v341, %v409
        %v411 = vpop.f32.mrf.mxu0
        %v412 = vadd.f32 %v341, %v411
        %v413 = vpop.f32.mrf.mxu0
        %v414 = vadd.f32 %v346, %v413
        %v415 = vpop.f32.mrf.mxu0
        %v416 = vadd.f32 %v346, %v415
        %417 = vmatprep.mubr.bf16.mxu0 0
        %418 = vmatmul.mubr.bf16.gmra.mxu0 %v373
        %v419 = vpop.f32.mrf.mxu0
        %v420 = vadd.f32 %v351, %v419
        %v421 = vpop.f32.mrf.mxu0
        %v422 = vadd.f32 %v351, %v421
        %v423 = vpop.f32.mrf.mxu0
        %v424 = vadd.f32 %v356, %v423
        %v425 = vpop.f32.mrf.mxu0
        %v426 = vadd.f32 %v356, %v425
        %427 = vdwg.mxu0
        %v428 = vmax.f32 %v410, 0.0
        %v429 = vmax.f32 %v412, 0.0
        %v430 = vmax.f32 %v414, 0.0
        %v431 = vmax.f32 %v416, 0.0
        %v432 = vmax.f32 %v420, 0.0
        %v433 = vmax.f32 %v422, 0.0
        %v434 = vmax.f32 %v424, 0.0
        %v435 = vmax.f32 %v426, 0.0
        %v436 = vpack.c.bf16 %v430, %v428
        %v437 = vpack.c.bf16 %v431, %v429
        %v438 = vpack.c.bf16 %v434, %v432
        %v439 = vpack.c.bf16 %v435, %v433
        %v440 = vld [vmem:[%s3] sm:$0xf]
        %v441 = vld [vmem:[%s3 + $0x4] sm:$0xf]
        %v442 = vld [vmem:[%s3 + $0x8] sm:$0xf]
        %v443 = vld [vmem:[%s3 + $0xc] sm:$0xf]
        %v444 = vld [vmem:[%s4] sm:$0xff]
        %v445 = vld [vmem:[%s4 + $0x8] sm:$0xff]
        %v446 = vld [vmem:[%s4 + $0x10] sm:$0xff]
        %v447 = vld [vmem:[%s4 + $0x18] sm:$0xff]
        %449 = vset.pattern.permute.xlu0 0
        %450 = vperm.xlu0 %449, %v444
        %v451 = vpop.permute.xlu0 %450
        %454 = vset.pattern.permute.xlu0 0
        %455 = vperm.xlu0 %454, %v445
        %v456 = vpop.permute.xlu0 %455
        %459 = vset.pattern.permute.xlu0 0
        %460 = vperm.xlu0 %459, %v446
        %v461 = vpop.permute.xlu0 %460
        %464 = vset.pattern.permute.xlu0 0
        %465 = vperm.xlu0 %464, %v447
        %v466 = vpop.permute.xlu0 %465
        %v472 = vunpack.c.l.b16 %v440
        %v473 = vunpack.c.l.b16 %v441
        %v474 = vunpack.c.l.b16 %v442
        %v475 = vunpack.c.l.b16 %v443
        %v476 = vpack.c.b16 %v473, %v472
        %v477 = vpack.c.b16 %v475, %v474
        %v479 = vsel %vm368, %v476, 0
        %v482 = vsel %vm368, %v477, 0
        %484 = vmatprep.subr.bf16.mxu0 0
        %485 = vmatpush1.bf16.msra.mxu0 0
        %486 = vmatprep.subr.bf16.mxu0 0
        %487 = vmatpush1.bf16.msra.mxu0 0
        %488 = vmatprep.subr.bf16.mxu0 0
        %489 = vmatpush1.bf16.msra.mxu0 0
        %490 = vmatprep.subr.bf16.mxu0 0
        %491 = vmatpush1.bf16.msra.mxu0 0
        %492 = vmatprep.subr.bf16.mxu0 0
        %493 = vmatpush1.bf16.msra.mxu0 0
        %494 = vmatprep.subr.bf16.mxu0 0
        %495 = vmatpush1.bf16.msra.mxu0 0
        %496 = vmatprep.subr.bf16.mxu0 %v439
        %497 = vmatpush1.bf16.msra.mxu0 %v438
        %498 = vmatprep.subr.bf16.mxu0 %v437
        %499 = vmatpush1.bf16.msra.mxu0 %v436
        %500 = vmatprep.subr.bf16.mxu0 0
        %501 = vmatpush2.bf16.msra.mxu0 0
        %502 = vmatprep.subr.bf16.mxu0 0
        %503 = vmatpush2.bf16.msra.mxu0 0
        %504 = vmatprep.subr.bf16.mxu0 0
        %505 = vmatpush2.bf16.msra.mxu0 0
        %506 = vmatprep.subr.bf16.mxu0 0
        %507 = vmatpush2.bf16.msra.mxu0 0
        %508 = vmatprep.subr.bf16.mxu0 0
        %509 = vmatpush2.bf16.msra.mxu0 0
        %510 = vmatprep.subr.bf16.mxu0 0
        %511 = vmatpush2.bf16.msra.mxu0 0
        %512 = vmatprep.subr.bf16.mxu0 0
        %513 = vmatpush2.bf16.msra.mxu0 0
        %514 = vmatprep.subr.bf16.mxu0 0
        %515 = vmatpush2.bf16.msra.mxu0 0
        %516 = vmatprep.mubr.bf16.mxu0 0
        %517 = vmatmul.mubr.bf16.gmra.mxu0 %v479
        %v518 = vpop.f32.mrf.mxu0
        %v519 = vadd.f32 %v451, %v518
        %v520 = vpop.f32.mrf.mxu0
        %v521 = vadd.f32 %v451, %v520
        %v522 = vpop.f32.mrf.mxu0
        %v523 = vadd.f32 %v456, %v522
        %v524 = vpop.f32.mrf.mxu0
        %v525 = vadd.f32 %v456, %v524
        %526 = vmatprep.mubr.bf16.mxu0 0
        %527 = vmatmul.mubr.bf16.gmra.mxu0 %v482
        %v528 = vpop.f32.mrf.mxu0
        %v529 = vadd.f32 %v461, %v528
        %v530 = vpop.f32.mrf.mxu0
        %v531 = vadd.f32 %v461, %v530
        %v532 = vpop.f32.mrf.mxu0
        %v533 = vadd.f32 %v466, %v532
        %v534 = vpop.f32.mrf.mxu0
        %v535 = vadd.f32 %v466, %v534
        %536 = vdwg.mxu0
        %v537 = vmax.f32 %v519, 0.0
        %v538 = vmax.f32 %v521, 0.0
        %v539 = vmax.f32 %v523, 0.0
        %v540 = vmax.f32 %v525, 0.0
        %v541 = vmax.f32 %v529, 0.0
        %v542 = vmax.f32 %v531, 0.0
        %v543 = vmax.f32 %v533, 0.0
        %v544 = vmax.f32 %v535, 0.0
        %v545 = vld [vmem:[%s5] sm:$0xf]
        %v546 = vld [vmem:[%s5 + $0x4] sm:$0xf]
        %v547 = vld [vmem:[%s5 + $0x8] sm:$0xf]
        %v548 = vld [vmem:[%s5 + $0xc] sm:$0xf]
        %v549 = vpack.c.bf16 %v539, %v537
        %v550 = vpack.c.bf16 %v540, %v538
        %v551 = vpack.c.bf16 %v543, %v541
        %v552 = vpack.c.bf16 %v544, %v542
        %v553 = vld [vmem:[%s6] sm:$0xff]
        %v554 = vld [vmem:[%s6 + $0x8] sm:$0xff]
        %v555 = vld [vmem:[%s6 + $0x10] sm:$0xff]
        %v556 = vld [vmem:[%s6 + $0x18] sm:$0xff]
        %558 = vset.pattern.permute.xlu0 0
        %559 = vperm.xlu0 %558, %v553
        %v560 = vpop.permute.xlu0 %559
        %563 = vset.pattern.permute.xlu0 0
        %564 = vperm.xlu0 %563, %v554
        %v565 = vpop.permute.xlu0 %564
        %568 = vset.pattern.permute.xlu0 0
        %569 = vperm.xlu0 %568, %v555
        %v570 = vpop.permute.xlu0 %569
        %573 = vset.pattern.permute.xlu0 0
        %574 = vperm.xlu0 %573, %v556
        %v575 = vpop.permute.xlu0 %574
        %v581 = vunpack.c.l.b16 %v545
        %v582 = vunpack.c.l.b16 %v546
        %v583 = vunpack.c.l.b16 %v547
        %v584 = vunpack.c.l.b16 %v548
        %v585 = vpack.c.b16 %v582, %v581
        %v586 = vpack.c.b16 %v584, %v583
        %v588 = vsel %vm368, %v585, 0
        %v591 = vsel %vm368, %v586, 0
        %593 = vmatprep.subr.bf16.mxu0 0
        %594 = vmatpush1.bf16.msra.mxu0 0
        %595 = vmatprep.subr.bf16.mxu0 0
        %596 = vmatpush1.bf16.msra.mxu0 0
        %597 = vmatprep.subr.bf16.mxu0 0
        %598 = vmatpush1.bf16.msra.mxu0 0
        %599 = vmatprep.subr.bf16.mxu0 0
        %600 = vmatpush1.bf16.msra.mxu0 0
        %601 = vmatprep.subr.bf16.mxu0 0
        %602 = vmatpush1.bf16.msra.mxu0 0
        %603 = vmatprep.subr.bf16.mxu0 0
        %604 = vmatpush1.bf16.msra.mxu0 0
        %605 = vmatprep.subr.bf16.mxu0 %v552
        %606 = vmatpush1.bf16.msra.mxu0 %v551
        %607 = vmatprep.subr.bf16.mxu0 %v550
        %608 = vmatpush1.bf16.msra.mxu0 %v549
        %609 = vmatprep.subr.bf16.mxu0 0
        %610 = vmatpush2.bf16.msra.mxu0 0
        %611 = vmatprep.subr.bf16.mxu0 0
        %612 = vmatpush2.bf16.msra.mxu0 0
        %613 = vmatprep.subr.bf16.mxu0 0
        %614 = vmatpush2.bf16.msra.mxu0 0
        %615 = vmatprep.subr.bf16.mxu0 0
        %616 = vmatpush2.bf16.msra.mxu0 0
        %617 = vmatprep.subr.bf16.mxu0 0
        %618 = vmatpush2.bf16.msra.mxu0 0
        %619 = vmatprep.subr.bf16.mxu0 0
        %620 = vmatpush2.bf16.msra.mxu0 0
        %621 = vmatprep.subr.bf16.mxu0 0
        %622 = vmatpush2.bf16.msra.mxu0 0
        %623 = vmatprep.subr.bf16.mxu0 0
        %624 = vmatpush2.bf16.msra.mxu0 0
        %625 = vmatprep.mubr.bf16.mxu0 0
        %626 = vmatmul.mubr.bf16.gmra.mxu0 %v588
        %v627 = vpop.f32.mrf.mxu0
        %v628 = vadd.f32 %v560, %v627
        %v629 = vpop.f32.mrf.mxu0
        %v630 = vadd.f32 %v560, %v629
        %v631 = vpop.f32.mrf.mxu0
        %v632 = vadd.f32 %v565, %v631
        %v633 = vpop.f32.mrf.mxu0
        %v634 = vadd.f32 %v565, %v633
        %635 = vmatprep.mubr.bf16.mxu0 0
        %636 = vmatmul.mubr.bf16.gmra.mxu0 %v591
        %v637 = vpop.f32.mrf.mxu0
        %v638 = vadd.f32 %v570, %v637
        %v639 = vpop.f32.mrf.mxu0
        %v640 = vadd.f32 %v570, %v639
        %v641 = vpop.f32.mrf.mxu0
        %v642 = vadd.f32 %v575, %v641
        %v643 = vpop.f32.mrf.mxu0
        %v644 = vadd.f32 %v575, %v643
        %645 = vdwg.mxu0
        %v646 = vunpack.c.l.bf16 %v436
        %v647 = vunpack.c.l.bf16 %v437
        %v648 = vunpack.c.h.bf16 %v436
        %v649 = vunpack.c.h.bf16 %v437
        %v650 = vunpack.c.l.bf16 %v438
        %v651 = vunpack.c.l.bf16 %v439
        %v652 = vunpack.c.h.bf16 %v438
        %v653 = vunpack.c.h.bf16 %v439
        %v654 = vadd.f32 %v628, %v646
        %v655 = vadd.f32 %v630, %v647
        %v656 = vadd.f32 %v632, %v648
        %v657 = vadd.f32 %v634, %v649
        %v658 = vadd.f32 %v638, %v650
        %v659 = vadd.f32 %v640, %v651
        %v660 = vadd.f32 %v642, %v652
        %v661 = vadd.f32 %v644, %v653
        %v662 = vmax.f32 %v654, 0.0
        %v663 = vmax.f32 %v655, 0.0
        %v664 = vmax.f32 %v656, 0.0
        %v665 = vmax.f32 %v657, 0.0
        %v666 = vmax.f32 %v658, 0.0
        %v667 = vmax.f32 %v659, 0.0
        %v668 = vmax.f32 %v660, 0.0
        %v669 = vmax.f32 %v661, 0.0
        %v670 = vpack.c.bf16 %v664, %v662
        %v671 = vpack.c.bf16 %v665, %v663
        %v672 = vpack.c.bf16 %v668, %v666
        %v673 = vpack.c.bf16 %v669, %v667
        %s674 = scalar_lea.vmem %s3, 16
        %v675 = vld [vmem:[%s674] sm:$0xf]
        %v676 = vld [vmem:[%s674 + $0x4] sm:$0xf]
        %v677 = vld [vmem:[%s674 + $0x8] sm:$0xf]
        %v678 = vld [vmem:[%s674 + $0xc] sm:$0xf]
        %s679 = scalar_lea.vmem %s4, 32
        %v680 = vld [vmem:[%s679] sm:$0xff]
        %v681 = vld [vmem:[%s679 + $0x8] sm:$0xff]
        %v682 = vld [vmem:[%s679 + $0x10] sm:$0xff]
        %v683 = vld [vmem:[%s679 + $0x18] sm:$0xff]
        %685 = vset.pattern.permute.xlu0 0
        %686 = vperm.xlu0 %685, %v680
        %v687 = vpop.permute.xlu0 %686
        %690 = vset.pattern.permute.xlu0 0
        %691 = vperm.xlu0 %690, %v681
        %v692 = vpop.permute.xlu0 %691
        %695 = vset.pattern.permute.xlu0 0
        %696 = vperm.xlu0 %695, %v682
        %v697 = vpop.permute.xlu0 %696
        %700 = vset.pattern.permute.xlu0 0
        %701 = vperm.xlu0 %700, %v683
        %v702 = vpop.permute.xlu0 %701
        %v708 = vunpack.c.l.b16 %v675
        %v709 = vunpack.c.l.b16 %v676
        %v710 = vunpack.c.l.b16 %v677
        %v711 = vunpack.c.l.b16 %v678
        %v712 = vpack.c.b16 %v709, %v708
        %v713 = vpack.c.b16 %v711, %v710
        %v715 = vsel %vm368, %v712, 0
        %v718 = vsel %vm368, %v713, 0
        %720 = vmatprep.subr.bf16.mxu0 0
        %721 = vmatpush1.bf16.msra.mxu0 0
        %722 = vmatprep.subr.bf16.mxu0 0
        %723 = vmatpush1.bf16.msra.mxu0 0
        %724 = vmatprep.subr.bf16.mxu0 0
        %725 = vmatpush1.bf16.msra.mxu0 0
        %726 = vmatprep.subr.bf16.mxu0 0
        %727 = vmatpush1.bf16.msra.mxu0 0
        %728 = vmatprep.subr.bf16.mxu0 0
        %729 = vmatpush1.bf16.msra.mxu0 0
        %730 = vmatprep.subr.bf16.mxu0 0
        %731 = vmatpush1.bf16.msra.mxu0 0
        %732 = vmatprep.subr.bf16.mxu0 %v673
        %733 = vmatpush1.bf16.msra.mxu0 %v672
        %734 = vmatprep.subr.bf16.mxu0 %v671
        %735 = vmatpush1.bf16.msra.mxu0 %v670
        %736 = vmatprep.subr.bf16.mxu0 0
        %737 = vmatpush2.bf16.msra.mxu0 0
        %738 = vmatprep.subr.bf16.mxu0 0
        %739 = vmatpush2.bf16.msra.mxu0 0
        %740 = vmatprep.subr.bf16.mxu0 0
        %741 = vmatpush2.bf16.msra.mxu0 0
        %742 = vmatprep.subr.bf16.mxu0 0
        %743 = vmatpush2.bf16.msra.mxu0 0
        %744 = vmatprep.subr.bf16.mxu0 0
        %745 = vmatpush2.bf16.msra.mxu0 0
        %746 = vmatprep.subr.bf16.mxu0 0
        %747 = vmatpush2.bf16.msra.mxu0 0
        %748 = vmatprep.subr.bf16.mxu0 0
        %749 = vmatpush2.bf16.msra.mxu0 0
        %750 = vmatprep.subr.bf16.mxu0 0
        %751 = vmatpush2.bf16.msra.mxu0 0
        %752 = vmatprep.mubr.bf16.mxu0 0
        %753 = vmatmul.mubr.bf16.gmra.mxu0 %v715
        %v754 = vpop.f32.mrf.mxu0
        %v755 = vadd.f32 %v687, %v754
        %v756 = vpop.f32.mrf.mxu0
        %v757 = vadd.f32 %v687, %v756
        %v758 = vpop.f32.mrf.mxu0
        %v759 = vadd.f32 %v692, %v758
        %v760 = vpop.f32.mrf.mxu0
        %v761 = vadd.f32 %v692, %v760
        %762 = vmatprep.mubr.bf16.mxu0 0
        %763 = vmatmul.mubr.bf16.gmra.mxu0 %v718
        %v764 = vpop.f32.mrf.mxu0
        %v765 = vadd.f32 %v697, %v764
        %v766 = vpop.f32.mrf.mxu0
        %v767 = vadd.f32 %v697, %v766
        %v768 = vpop.f32.mrf.mxu0
        %v769 = vadd.f32 %v702, %v768
        %v770 = vpop.f32.mrf.mxu0
        %v771 = vadd.f32 %v702, %v770
        %772 = vdwg.mxu0
        %v773 = vmax.f32 %v755, 0.0
        %v774 = vmax.f32 %v757, 0.0
        %v775 = vmax.f32 %v759, 0.0
        %v776 = vmax.f32 %v761, 0.0
        %v777 = vmax.f32 %v765, 0.0
        %v778 = vmax.f32 %v767, 0.0
        %v779 = vmax.f32 %v769, 0.0
        %v780 = vmax.f32 %v771, 0.0
        %s781 = scalar_lea.vmem %s5, 16
        %v782 = vld [vmem:[%s781] sm:$0xf]
        %v783 = vld [vmem:[%s781 + $0x4] sm:$0xf]
        %v784 = vld [vmem:[%s781 + $0x8] sm:$0xf]
        %v785 = vld [vmem:[%s781 + $0xc] sm:$0xf]
        %v786 = vpack.c.bf16 %v775, %v773
        %v787 = vpack.c.bf16 %v776, %v774
        %v788 = vpack.c.bf16 %v779, %v777
        %v789 = vpack.c.bf16 %v780, %v778
        %s790 = scalar_lea.vmem %s6, 32
        %v791 = vld [vmem:[%s790] sm:$0xff]
        %v792 = vld [vmem:[%s790 + $0x8] sm:$0xff]
        %v793 = vld [vmem:[%s790 + $0x10] sm:$0xff]
        %v794 = vld [vmem:[%s790 + $0x18] sm:$0xff]
        %796 = vset.pattern.permute.xlu0 0
        %797 = vperm.xlu0 %796, %v791
        %v798 = vpop.permute.xlu0 %797
        %801 = vset.pattern.permute.xlu0 0
        %802 = vperm.xlu0 %801, %v792
        %v803 = vpop.permute.xlu0 %802
        %806 = vset.pattern.permute.xlu0 0
        %807 = vperm.xlu0 %806, %v793
        %v808 = vpop.permute.xlu0 %807
        %811 = vset.pattern.permute.xlu0 0
        %812 = vperm.xlu0 %811, %v794
        %v813 = vpop.permute.xlu0 %812
        %v819 = vunpack.c.l.b16 %v782
        %v820 = vunpack.c.l.b16 %v783
        %v821 = vunpack.c.l.b16 %v784
        %v822 = vunpack.c.l.b16 %v785
        %v823 = vpack.c.b16 %v820, %v819
        %v824 = vpack.c.b16 %v822, %v821
        %v826 = vsel %vm368, %v823, 0
        %v829 = vsel %vm368, %v824, 0
        %831 = vmatprep.subr.bf16.mxu0 0
        %832 = vmatpush1.bf16.msra.mxu0 0
        %833 = vmatprep.subr.bf16.mxu0 0
        %834 = vmatpush1.bf16.msra.mxu0 0
        %835 = vmatprep.subr.bf16.mxu0 0
        %836 = vmatpush1.bf16.msra.mxu0 0
        %837 = vmatprep.subr.bf16.mxu0 0
        %838 = vmatpush1.bf16.msra.mxu0 0
        %839 = vmatprep.subr.bf16.mxu0 0
        %840 = vmatpush1.bf16.msra.mxu0 0
        %841 = vmatprep.subr.bf16.mxu0 0
        %842 = vmatpush1.bf16.msra.mxu0 0
        %843 = vmatprep.subr.bf16.mxu0 %v789
        %844 = vmatpush1.bf16.msra.mxu0 %v788
        %845 = vmatprep.subr.bf16.mxu0 %v787
        %846 = vmatpush1.bf16.msra.mxu0 %v786
        %847 = vmatprep.subr.bf16.mxu0 0
        %848 = vmatpush2.bf16.msra.mxu0 0
        %849 = vmatprep.subr.bf16.mxu0 0
        %850 = vmatpush2.bf16.msra.mxu0 0
        %851 = vmatprep.subr.bf16.mxu0 0
        %852 = vmatpush2.bf16.msra.mxu0 0
        %853 = vmatprep.subr.bf16.mxu0 0
        %854 = vmatpush2.bf16.msra.mxu0 0
        %855 = vmatprep.subr.bf16.mxu0 0
        %856 = vmatpush2.bf16.msra.mxu0 0
        %857 = vmatprep.subr.bf16.mxu0 0
        %858 = vmatpush2.bf16.msra.mxu0 0
        %859 = vmatprep.subr.bf16.mxu0 0
        %860 = vmatpush2.bf16.msra.mxu0 0
        %861 = vmatprep.subr.bf16.mxu0 0
        %862 = vmatpush2.bf16.msra.mxu0 0
        %863 = vmatprep.mubr.bf16.mxu0 0
        %864 = vmatmul.mubr.bf16.gmra.mxu0 %v826
        %v865 = vpop.f32.mrf.mxu0
        %v866 = vadd.f32 %v798, %v865
        %v867 = vpop.f32.mrf.mxu0
        %v868 = vadd.f32 %v798, %v867
        %v869 = vpop.f32.mrf.mxu0
        %v870 = vadd.f32 %v803, %v869
        %v871 = vpop.f32.mrf.mxu0
        %v872 = vadd.f32 %v803, %v871
        %873 = vmatprep.mubr.bf16.mxu0 0
        %874 = vmatmul.mubr.bf16.gmra.mxu0 %v829
        %v875 = vpop.f32.mrf.mxu0
        %v876 = vadd.f32 %v808, %v875
        %v877 = vpop.f32.mrf.mxu0
        %v878 = vadd.f32 %v808, %v877
        %v879 = vpop.f32.mrf.mxu0
        %v880 = vadd.f32 %v813, %v879
        %v881 = vpop.f32.mrf.mxu0
        %v882 = vadd.f32 %v813, %v881
        %883 = vdwg.mxu0
        %v884 = vunpack.c.l.bf16 %v670
        %v885 = vunpack.c.l.bf16 %v671
        %v886 = vunpack.c.h.bf16 %v670
        %v887 = vunpack.c.h.bf16 %v671
        %v888 = vunpack.c.l.bf16 %v672
        %v889 = vunpack.c.l.bf16 %v673
        %v890 = vunpack.c.h.bf16 %v672
        %v891 = vunpack.c.h.bf16 %v673
        %v892 = vadd.f32 %v866, %v884
        %v893 = vadd.f32 %v868, %v885
        %v894 = vadd.f32 %v870, %v886
        %v895 = vadd.f32 %v872, %v887
        %v896 = vadd.f32 %v876, %v888
        %v897 = vadd.f32 %v878, %v889
        %v898 = vadd.f32 %v880, %v890
        %v899 = vadd.f32 %v882, %v891
        %v900 = vmax.f32 %v892, 0.0
        %v901 = vmax.f32 %v893, 0.0
        %v902 = vmax.f32 %v894, 0.0
        %v903 = vmax.f32 %v895, 0.0
        %v904 = vmax.f32 %v896, 0.0
        %v905 = vmax.f32 %v897, 0.0
        %v906 = vmax.f32 %v898, 0.0
        %v907 = vmax.f32 %v899, 0.0
        %v908 = vpack.c.bf16 %v902, %v900
        %v909 = vpack.c.bf16 %v903, %v901
        %v910 = vpack.c.bf16 %v906, %v904
        %v911 = vpack.c.bf16 %v907, %v905
        %v916 = vunpack.c.l.b16 %v908
        %v917 = vunpack.c.l.b16 %v909
        %v918 = vunpack.c.h.b16 %v908
        %v919 = vunpack.c.h.b16 %v909
        %v920 = vunpack.c.l.b16 %v910
        %v921 = vunpack.c.l.b16 %v911
        %v922 = vunpack.c.h.b16 %v910
        %v923 = vunpack.c.h.b16 %v911
        %v924 = vpack.c.b16 %v917, %v916
        %v925 = vpack.c.b16 %v919, %v918
        %v926 = vpack.c.b16 %v921, %v920
        %v927 = vpack.c.b16 %v923, %v922
        %932 = vst [vmem:[%s314] sm:$0xff] %v924
        %933 = vst [vmem:[%s314 + $0x8] sm:$0xff] %v925
        %934 = vst [vmem:[%s314 + $0x10] sm:$0xff] %v926
        %935 = vst [vmem:[%s314 + $0x18] sm:$0xff] %v927
        %s936 = sand.u32 %s200, 1
        %s937 = scalar_lea.sflag [#allocation4], %s936
        %s938 = sand.u32 %s200, 1
        %s939 = smul.addr %s938, 32
        %s940 = scalar_lea.vmem [#allocation5], %s939
        // Predicated region
        $region53: #{tpu_custom_call.1} parent=47 // pred_check
          %p941 = pneg %p210
        $region54: #{tpu_custom_call.1} parent=47 // pred_check_branch
          %943 = sbr.rel (%p941) target = $region56
        $region55: #{tpu_custom_call.1} parent=47 // pred_region
          %s944 = smul.u32 2, %s29
          %s946 = ssub.s32 512, 512
          %947 = vsyncadd %s937, %s946
          %s948 = smul.addr %s28, 16
          %s949 = sadd.s32 %s944, %s948
          %s950 = smul.addr %s949, 64
          %s951 = scalar_lea.hbm %s7, %s950
          %s952 = sshll.u32 %s940, 4
          %s953 = int_to_ptr.vmem [resolvable:$true] %s952
          %958 = dma.vmem_to_hbm [thread:$0]  %s953, 512, %s951, %s937, 128, 256, 8
        $region56: #{tpu_custom_call.1} parent=47 // pred_fallthru
          _
      $region48: #{tpu_custom_call.1} parent=5 // pred_fallthru
        _
      %p959 = scmp.le.s32.totalorder 2, %s19
      // Predicated region
      $region57: #{tpu_custom_call.1} parent=5 // pred_check
        %p960 = pneg %p959
      $region58: #{tpu_custom_call.1} parent=5 // pred_check_branch
        %962 = sbr.rel (%p960) target = $region60
      $region59: #{tpu_custom_call.1} parent=5 // pred_region
        %s963 = ssub.s32 %s19, 2
        // Predicated region
        $region61: #{tpu_custom_call.1} parent=59 // pred_check
          %p964 = pneg %p216
        $region62: #{tpu_custom_call.1} parent=59 // pred_check_branch
          %966 = sbr.rel (%p964) target = $region64
        $region63: #{tpu_custom_call.1} parent=59 // pred_region
          %s967 = sand.u32 %s201, 1
          %s968 = scalar_lea.sflag [#allocation4], %s967
          %s969 = sand.u32 %s201, 1
          %s970 = smul.addr %s969, 32
          %s971 = scalar_lea.vmem [#allocation5], %s970
          %972 = dma.done %s968, 512
        $region64: #{tpu_custom_call.1} parent=59 // pred_fallthru
          _
      $region60: #{tpu_custom_call.1} parent=5 // pred_fallthru
        _
    $region6: #{tpu_custom_call.1} parent=1 // loop_footer
      %s23 = sadd.s32 1, %s19
    $region7: #{tpu_custom_call.1} parent=1 // loop_footer_branch
      %18 = sbr.rel target = $region3
    $region8: #{tpu_custom_call.1} parent=1 // loop_exit
      _
    %973 = vsyncpa [#allocation3], 1
    %s974 = scalar_lea.sflag [#allocation3], 1
    %975 = vsyncpa %s974, 1
    %976 = vsyncpa [#allocation4], 1
    %s977 = scalar_lea.sflag [#allocation4], 1
    %978 = vsyncpa %s977, 1

</llo_original>
